<compile_context>
chip_gen: v7x
topology: tpu7x:2x2x1
jax: 0.10.0
libtpu: 0.0.40
codegen_flags: <defaults>
</compile_context>

<pallas_src>
from math import sqrt

import jax
import jax.numpy as jnp
from jax.experimental import pallas as pl
from jax.experimental.pallas import tpu as pltpu


def _silu(v):
    # sigmoid(v) = 0.5 * (tanh(v / 2) + 1): numerically stable and tanh is a
    # single EUP op with a guaranteed Mosaic lowering.
    return v * (0.5 * (jnp.tanh(0.5 * v) + 1.0))


def _diffusion_embedding_kernel(idx_ref, frac_ref, emb_ref, w1t_ref, b1_ref,
                                w2t_ref, b2_ref, o_ref):
    """Fused: table lerp -> Linear -> SiLU -> Linear -> SiLU.

    idx_ref:  SMEM int32[2]          -- floor(t), ceil(t)
    frac_ref: SMEM f32[1]            -- t - floor(t)   (0 for integer steps)
    emb_ref:  VMEM [max_steps, 2E]   -- sinusoidal table
    w1t_ref:  VMEM [2E, D]           -- input_projection.weight, transposed
    b1_ref:   VMEM [1, D]
    w2t_ref:  VMEM [D, D]            -- output_projection.weight, transposed
    b2_ref:   VMEM [1, D]
    o_ref:    VMEM [1, D]
    """
    low_i = idx_ref[0]
    high_i = idx_ref[1]
    frac = frac_ref[0]

    low = emb_ref[pl.ds(low_i, 1), :]        # [1, 2E]
    high = emb_ref[pl.ds(high_i, 1), :]      # [1, 2E]
    # Lerp; for integer diffusion steps frac == 0 and this is exactly the
    # table row, matching the PyTorch integer branch.
    x = low + (high - low) * frac            # [1, 2E]

    # Broadcast the single row across a full sublane tile so both matmuls are
    # full-tile (8, K) @ (K, 512) MXU ops with lane-dense (512-wide) results.
    x8 = jnp.broadcast_to(x, (8, x.shape[1]))

    h = jnp.dot(x8, w1t_ref[...], preferred_element_type=jnp.float32) + b1_ref[...]
    h = _silu(h)
    y = jnp.dot(h, w2t_ref[...], preferred_element_type=jnp.float32) + b2_ref[...]
    y = _silu(y)

    o_ref[...] = y[0:1, :]


def diffusion_embedding(diffusion_step, embedding, w1, b1, w2, b2):
    """Forward pass of DiffusionEmbedding.

    diffusion_step: Python / JAX scalar, int or float.
    embedding: [max_steps, 2*embedding_dim] f32 sinusoidal table.
    w1: [D, 2E], b1: [D], w2: [D, D], b2: [D]   (PyTorch nn.Linear layout).
    Returns: [D] f32.
    """
    D = w1.shape[0]

    t = jnp.asarray(diffusion_step, jnp.float32)
    low_idx = jnp.floor(t)
    high_idx = jnp.ceil(t)
    idx = jnp.stack([low_idx, high_idx]).astype(jnp.int32)      # [2] scalars
    frac = (t - low_idx).reshape(1).astype(jnp.float32)         # [1] scalar

    out = pl.pallas_call(
        _diffusion_embedding_kernel,
        out_shape=jax.ShapeDtypeStruct((1, D), jnp.float32),
        in_specs=[
            pl.BlockSpec(memory_space=pltpu.MemorySpace.SMEM),  # idx
            pl.BlockSpec(memory_space=pltpu.MemorySpace.SMEM),  # frac
            pl.BlockSpec(memory_space=pltpu.MemorySpace.VMEM),  # embedding table
            pl.BlockSpec(memory_space=pltpu.MemorySpace.VMEM),  # W1^T
            pl.BlockSpec(memory_space=pltpu.MemorySpace.VMEM),  # b1
            pl.BlockSpec(memory_space=pltpu.MemorySpace.VMEM),  # W2^T
            pl.BlockSpec(memory_space=pltpu.MemorySpace.VMEM),  # b2
        ],
        out_specs=pl.BlockSpec(memory_space=pltpu.MemorySpace.VMEM),
    )(
        idx, frac,
        embedding.astype(jnp.float32),
        w1.T.astype(jnp.float32), b1.reshape(1, D).astype(jnp.float32),
        w2.T.astype(jnp.float32), b2.reshape(1, D).astype(jnp.float32),
    )
    return out[0]


# ------------------------- table build + reference --------------------------
def build_embedding(max_steps, embedding_dim):
    """Same table as PyTorch _build_embedding()."""
    steps = jnp.arange(max_steps, dtype=jnp.float32)[:, None]
    dims = jnp.arange(embedding_dim, dtype=jnp.float32)[None, :]
    table = steps * 10.0 ** (dims * 4.0 / (embedding_dim - 1))
    return jnp.concatenate([jnp.sin(table), jnp.cos(table)], axis=1)


def _ref_forward(diffusion_step, embedding, w1, b1, w2, b2):
    """Pure-JAX reference mirroring the PyTorch forward."""
    t = jnp.asarray(diffusion_step, jnp.float32)
    low_idx = jnp.floor(t).astype(jnp.int32)
    high_idx = jnp.ceil(t).astype(jnp.int32)
    low = embedding[low_idx]
    high = embedding[high_idx]
    x = low + (high - low) * (t - low_idx)        # == embedding[t] for int t
    x = _silu(x @ w1.T + b1)
    x = _silu(x @ w2.T + b2)
    return x


if __name__ == "__main__":
    key = jax.random.PRNGKey(0)
    k1, k2, k3, k4 = jax.random.split(key, 4)

    max_steps, embedding_dim, diffusion_dim = 50, 64, 512
    embedding = build_embedding(max_steps, embedding_dim)       # [50, 128]

    in_dim = 2 * embedding_dim
    bound1 = 1.0 / sqrt(in_dim)
    w1 = jax.random.uniform(k1, (diffusion_dim, in_dim), jnp.float32, -bound1, bound1)
    b1 = jax.random.uniform(k2, (diffusion_dim,), jnp.float32, -bound1, bound1)
    bound2 = 1.0 / sqrt(diffusion_dim)
    w2 = jax.random.uniform(k3, (diffusion_dim, diffusion_dim), jnp.float32, -bound2, bound2)
    b2 = jax.random.uniform(k4, (diffusion_dim,), jnp.float32, -bound2, bound2)

    # Exercise both module branches: integer step and fractional (lerp) step.
    for step in (7, 3.7, float(max_steps - 1)):
        y = jax.block_until_ready(diffusion_embedding(step, embedding, w1, b1, w2, b2))
        assert y.shape == (diffusion_dim,), y.shape
        y_ref = jax.block_until_ready(_ref_forward(step, embedding, w1, b1, w2, b2))
        max_err = float(jnp.max(jnp.abs(y - y_ref)))
        assert max_err < 1e-4, f"step={step}: mismatch vs reference, max abs err={max_err}"

    print("KERNEL_OK")
</pallas_src>

<mosaic_0001>
module attributes {stable_mosaic.version = 11 : i64} {
  func.func @_diffusion_embedding_kernel(%arg0: memref<2xi32, #tpu.memory_space<smem>>, %arg1: memref<1xf32, #tpu.memory_space<smem>>, %arg2: memref<50x128xf32, #tpu.memory_space<vmem>>, %arg3: memref<128x512xf32, #tpu.memory_space<vmem>>, %arg4: memref<1x512xf32, #tpu.memory_space<vmem>>, %arg5: memref<512x512xf32, #tpu.memory_space<vmem>>, %arg6: memref<1x512xf32, #tpu.memory_space<vmem>>, %arg7: memref<1x512xf32, #tpu.memory_space<vmem>>) attributes {dimension_semantics = [], scalar_prefetch = 0 : i64, scratch_operands = 0 : i64, tpu.core_type = #tpu.core_type<tc>} {
    %c0 = arith.constant 0 : index
    %0 = memref.load %arg0[%c0] : memref<2xi32, #tpu.memory_space<smem>>
    %c1 = arith.constant 1 : index
    %1 = memref.load %arg0[%c1] : memref<2xi32, #tpu.memory_space<smem>>
    %c0_0 = arith.constant 0 : index
    %2 = memref.load %arg1[%c0_0] : memref<1xf32, #tpu.memory_space<smem>>
    %3 = arith.index_cast %0 : i32 to index
    %c0_1 = arith.constant 0 : index
    %4 = vector.load %arg2[%3, %c0_1] : memref<50x128xf32, #tpu.memory_space<vmem>>, vector<1x128xf32>
    %5 = arith.index_cast %1 : i32 to index
    %c0_2 = arith.constant 0 : index
    %6 = vector.load %arg2[%5, %c0_2] : memref<50x128xf32, #tpu.memory_space<vmem>>, vector<1x128xf32>
    %7 = arith.subf %6, %4 : vector<1x128xf32>
    %8 = vector.broadcast %2 : f32 to vector<1x128xf32>
    %9 = arith.mulf %7, %8 : vector<1x128xf32>
    %10 = arith.addf %4, %9 : vector<1x128xf32>
    %11 = vector.shape_cast %10 : vector<1x128xf32> to vector<1x128xf32>
    %12 = vector.broadcast %11 : vector<1x128xf32> to vector<8x128xf32>
    %c0_3 = arith.constant 0 : index
    %c0_4 = arith.constant 0 : index
    %13 = vector.load %arg3[%c0_3, %c0_4] : memref<128x512xf32, #tpu.memory_space<vmem>>, vector<128x512xf32>
    %cst = arith.constant dense<0.000000e+00> : vector<8x512xf32>
    %14 = tpu.matmul %12, %13, %cst {dimension_numbers = #tpu.dot_dimension_numbers<[1], [0], [0], [1], [0, 0, 1, 1], [], []>} : vector<8x128xf32>, vector<128x512xf32>, vector<8x512xf32> -> vector<8x512xf32>
    %c0_5 = arith.constant 0 : index
    %c0_6 = arith.constant 0 : index
    %15 = vector.load %arg4[%c0_5, %c0_6] : memref<1x512xf32, #tpu.memory_space<vmem>>, vector<1x512xf32>
    %16 = vector.broadcast %15 : vector<1x512xf32> to vector<8x512xf32>
    %17 = arith.addf %14, %16 : vector<8x512xf32>
    %cst_7 = arith.constant 5.000000e-01 : f32
    %18 = vector.broadcast %cst_7 : f32 to vector<8x512xf32>
    %19 = arith.mulf %18, %17 : vector<8x512xf32>
    %20 = math.tanh %19 : vector<8x512xf32>
    %cst_8 = arith.constant 1.000000e+00 : f32
    %21 = vector.broadcast %cst_8 : f32 to vector<8x512xf32>
    %22 = arith.addf %20, %21 : vector<8x512xf32>
    %cst_9 = arith.constant 5.000000e-01 : f32
    %23 = vector.broadcast %cst_9 : f32 to vector<8x512xf32>
    %24 = arith.mulf %23, %22 : vector<8x512xf32>
    %25 = arith.mulf %17, %24 : vector<8x512xf32>
    %c0_10 = arith.constant 0 : index
    %c0_11 = arith.constant 0 : index
    %26 = vector.load %arg5[%c0_10, %c0_11] : memref<512x512xf32, #tpu.memory_space<vmem>>, vector<512x512xf32>
    %cst_12 = arith.constant dense<0.000000e+00> : vector<8x512xf32>
    %27 = tpu.matmul %25, %26, %cst_12 {dimension_numbers = #tpu.dot_dimension_numbers<[1], [0], [0], [1], [0, 0, 1, 1], [], []>} : vector<8x512xf32>, vector<512x512xf32>, vector<8x512xf32> -> vector<8x512xf32>
    %c0_13 = arith.constant 0 : index
    %c0_14 = arith.constant 0 : index
    %28 = vector.load %arg6[%c0_13, %c0_14] : memref<1x512xf32, #tpu.memory_space<vmem>>, vector<1x512xf32>
    %29 = vector.broadcast %28 : vector<1x512xf32> to vector<8x512xf32>
    %30 = arith.addf %27, %29 : vector<8x512xf32>
    %cst_15 = arith.constant 5.000000e-01 : f32
    %31 = vector.broadcast %cst_15 : f32 to vector<8x512xf32>
    %32 = arith.mulf %31, %30 : vector<8x512xf32>
    %33 = math.tanh %32 : vector<8x512xf32>
    %cst_16 = arith.constant 1.000000e+00 : f32
    %34 = vector.broadcast %cst_16 : f32 to vector<8x512xf32>
    %35 = arith.addf %33, %34 : vector<8x512xf32>
    %cst_17 = arith.constant 5.000000e-01 : f32
    %36 = vector.broadcast %cst_17 : f32 to vector<8x512xf32>
    %37 = arith.mulf %36, %35 : vector<8x512xf32>
    %38 = arith.mulf %30, %37 : vector<8x512xf32>
    %39 = vector.extract_strided_slice %38 {offsets = [0, 0], sizes = [1, 512], strides = [1, 1]} : vector<8x512xf32> to vector<1x512xf32>
    %c0_18 = arith.constant 0 : index
    %c0_19 = arith.constant 0 : index
    %40 = vector.load %arg7[%c0_18, %c0_19] : memref<1x512xf32, #tpu.memory_space<vmem>>, vector<1x512xf32>
    tpu.vector_store %arg7[%c0_18, %c0_19], %39 {strides = array<i32>} : memref<1x512xf32, #tpu.memory_space<vmem>>, vector<1x512xf32>,
    return
  }
}

</mosaic_0001>

<llo_original>
// kernel: tpu_custom_call.1
$region0: #{tpu_custom_call.1}
  #allocation0 [shape = 'u32[]', space=smem, size = 0x4, offset = 0x4, fixed_abs, tag = 'smem constant byte address 0x4 - core index']
  #allocation1 [shape = 'u32[144,128]{1,0:T(1,128)}', space=vmem, size = 0x12000, scoped, tag = 'internal scratch']
  #allocation2 [shape = 'f32[1]{0:T(128)S(6)}', space=smem, size = 0x200, scoped, tag = 'scoped memory for tpu_custom_call.1']
  %s0 = inlined_call_operand.vmem [shape: s32[2], index: 0, kind: input, shape index: {}]
  %s1 = inlined_call_operand.<no memory space> [shape: f32[1], index: 1, kind: input, shape index: {}]
  %s2 = inlined_call_operand.hbm [shape: f32[50,128], index: 2, kind: input, shape index: {}]
  %s3 = inlined_call_operand.hbm [shape: f32[128,512], index: 3, kind: input, shape index: {}]
  %s4 = inlined_call_operand.vmem [shape: f32[1,512], index: 4, kind: input, shape index: {}]
  %s5 = inlined_call_operand.hbm [shape: f32[512,512], index: 5, kind: input, shape index: {}]
  %s6 = inlined_call_operand.vmem [shape: f32[1,512], index: 6, kind: input, shape index: {}]
  %s7 = inlined_call_operand.hbm [shape: f32[1,512], index: 7, kind: output, shape index: {}]
  %s8 = sld [smem:[#allocation0]]
  $region54: #{tpu_custom_call.1} parent=0
    _
  %s10 = ssub.s32 1, %s8
  %s11 = scalar_select 0, %s10, %s8
  %12 = sst [smem:[#allocation2]] %s1
  $region1: #{tpu_custom_call.1} parent=0
    #allocation3 [shape = 'u8[512]{0}', space=smem, size = 0x200, scoped, tag = 'input window, operand 0, single buffered']
    #allocation4 [shape = 's32[1]{0}', space=sflag, size = 0x4, scoped, tag = 'scoped memory for tpu_custom_call.1']
    #allocation5 [shape = 's32[1]{0}', space=sflag, size = 0x4, scoped, tag = 'scoped memory for tpu_custom_call.1']
    #allocation6 [shape = 's32[1]{0}', space=sflag, size = 0x4, scoped, tag = 'scoped memory for tpu_custom_call.1']
    #allocation7 [shape = 'u8[28672]{0}', space=vmem, size = 0x7000, scoped, tag = 'input window, operand 2, single buffered']
    #allocation8 [shape = 'u8[262144]{0}', space=vmem, size = 0x40000, scoped, tag = 'input window, operand 3, single buffered']
    #allocation9 [shape = 's32[1]{0}', space=sflag, size = 0x4, scoped, tag = 'scoped memory for tpu_custom_call.1']
    #allocation10 [shape = 'u8[1048576]{0}', space=vmem, size = 0x100000, scoped, tag = 'input window, operand 5, single buffered']
    #allocation11 [shape = 'u8[2048]{0}', space=vmem, size = 0x800, scoped, tag = 'output window, operand 0, single buffered']
    %13 = vsyncpa [#allocation6], 0
    %14 = vsyncpa [#allocation4], 0
    %15 = vsyncpa [#allocation9], 0
    %16 = vsyncpa [#allocation5], 0
    // Predicated region
    $region2: #{tpu_custom_call.1} parent=1 // pred_check
      _
    $region3: #{tpu_custom_call.1} parent=1 // pred_check_branch
      %18 = sbr.rel (0) target = $region5
    $region4: #{tpu_custom_call.1} parent=1 // pred_region
      %s20 = ssub.s32 16, 16
      %21 = vsyncadd [#allocation6], %s20
      %s23 = sshll.u32 %s0, 4
      %s24 = int_to_ptr.vmem [resolvable:$true] %s23
      %26 = dma.vmem_to_smem %s24, 16, [#allocation3], [#allocation6]
    $region5: #{tpu_custom_call.1} parent=1 // pred_fallthru
      _
    // Predicated region
    $region6: #{tpu_custom_call.1} parent=1 // pred_check
      _
    $region7: #{tpu_custom_call.1} parent=1 // pred_check_branch
      %28 = sbr.rel (0) target = $region9
    $region8: #{tpu_custom_call.1} parent=1 // pred_region
      _
    $region9: #{tpu_custom_call.1} parent=1 // pred_fallthru
      _
    // Predicated region
    $region10: #{tpu_custom_call.1} parent=1 // pred_check
      _
    $region11: #{tpu_custom_call.1} parent=1 // pred_check_branch
      %30 = sbr.rel (0) target = $region13
    $region12: #{tpu_custom_call.1} parent=1 // pred_region
      %s32 = ssub.s32 896, 896
      %33 = vsyncadd [#allocation4], %s32
      %s34 = sshll.u32 [#allocation7], 4
      %s35 = int_to_ptr.vmem [resolvable:$true] %s34
      %40 = dma.hbm_to_vmem [thread:$0]  %s2, 896, %s35, [#allocation4], 128, 128, 8
    $region13: #{tpu_custom_call.1} parent=1 // pred_fallthru
      _
    // Predicated region
    $region14: #{tpu_custom_call.1} parent=1 // pred_check
      _
    $region15: #{tpu_custom_call.1} parent=1 // pred_check_branch
      %42 = sbr.rel (0) target = $region17
    $region16: #{tpu_custom_call.1} parent=1 // pred_region
      %s44 = ssub.s32 8192, 8192
      %45 = vsyncadd [#allocation9], %s44
      %s46 = sshll.u32 [#allocation8], 4
      %s47 = int_to_ptr.vmem [resolvable:$true] %s46
      %52 = dma.hbm_to_vmem [thread:$0]  %s3, 8192, %s47, [#allocation9], 512, 512, 32
    $region17: #{tpu_custom_call.1} parent=1 // pred_fallthru
      _
    // Predicated region
    $region18: #{tpu_custom_call.1} parent=1 // pred_check
      _
    $region19: #{tpu_custom_call.1} parent=1 // pred_check_branch
      %54 = sbr.rel (0) target = $region21
    $region20: #{tpu_custom_call.1} parent=1 // pred_region
      _
    $region21: #{tpu_custom_call.1} parent=1 // pred_fallthru
      _
    // Predicated region
    $region22: #{tpu_custom_call.1} parent=1 // pred_check
      _
    $region23: #{tpu_custom_call.1} parent=1 // pred_check_branch
      %56 = sbr.rel (0) target = $region25
    $region24: #{tpu_custom_call.1} parent=1 // pred_region
      %s58 = ssub.s32 32768, 32768
      %59 = vsyncadd [#allocation9], %s58
      %s60 = sshll.u32 [#allocation10], 4
      %s61 = int_to_ptr.vmem [resolvable:$true] %s60
      %66 = dma.hbm_to_vmem [thread:$0]  %s5, 32768, %s61, [#allocation9], 512, 512, 32
    $region25: #{tpu_custom_call.1} parent=1 // pred_fallthru
      _
    // Predicated region
    $region26: #{tpu_custom_call.1} parent=1 // pred_check
      _
    $region27: #{tpu_custom_call.1} parent=1 // pred_check_branch
      %68 = sbr.rel (0) target = $region29
    $region28: #{tpu_custom_call.1} parent=1 // pred_region
      _
    $region29: #{tpu_custom_call.1} parent=1 // pred_fallthru
      _
    // Predicated region
    $region30: #{tpu_custom_call.1} parent=1 // pred_check
      _
    $region31: #{tpu_custom_call.1} parent=1 // pred_check_branch
      %70 = sbr.rel (0) target = $region33
    $region32: #{tpu_custom_call.1} parent=1 // pred_region
      %71 = dma.done [#allocation6], 16
    $region33: #{tpu_custom_call.1} parent=1 // pred_fallthru
      _
    // Predicated region
    $region34: #{tpu_custom_call.1} parent=1 // pred_check
      _
    $region35: #{tpu_custom_call.1} parent=1 // pred_check_branch
      %73 = sbr.rel (0) target = $region37
    $region36: #{tpu_custom_call.1} parent=1 // pred_region
      %74 = dma.done [#allocation4], 896
    $region37: #{tpu_custom_call.1} parent=1 // pred_fallthru
      _
    // Predicated region
    $region38: #{tpu_custom_call.1} parent=1 // pred_check
      _
    $region39: #{tpu_custom_call.1} parent=1 // pred_check_branch
      %76 = sbr.rel (0) target = $region41
    $region40: #{tpu_custom_call.1} parent=1 // pred_region
      %77 = dma.done [#allocation9], 8192
    $region41: #{tpu_custom_call.1} parent=1 // pred_fallthru
      _
    // Predicated region
    $region42: #{tpu_custom_call.1} parent=1 // pred_check
      _
    $region43: #{tpu_custom_call.1} parent=1 // pred_check_branch
      %79 = sbr.rel (0) target = $region45
    $region44: #{tpu_custom_call.1} parent=1 // pred_region
      %80 = dma.done [#allocation9], 32768
    $region45: #{tpu_custom_call.1} parent=1 // pred_fallthru
      _
    %81 = sfence
    %s82 = sld [smem:[#allocation3]]
    %s83 = sld [smem:[#allocation3 + $0x1]]
    %s84 = sld [smem:[#allocation2]]
    %s85 = scalar_lea.vmem [#allocation7], %s82
    %v86 = vld [vmem:[%s85] sm:$0x1]
    %s87 = scalar_lea.vmem [#allocation7], %s83
    %v88 = vld [vmem:[%s87] sm:$0x1]
    %v89 = vsub.f32 %v88, %v86
    %v90 = vstv %s84
    %v91 = vmul.f32 %v89, %v90
    %v92 = vadd.f32 %v86, %v91
    %v93 = vlaneseq
    %v94 = vshrl.u32 %v93, 7
    %v95 = vsub.s32 0, %v94
    %v96 = vrot.slane %v92, %v95
    %v97 = vld [vmem:[#allocation8] sm:$0xff]
    %v98 = vld [vmem:[#allocation8 + $0x8] sm:$0xff]
    %v99 = vld [vmem:[#allocation8 + $0x10] sm:$0xff]
    %v100 = vld [vmem:[#allocation8 + $0x18] sm:$0xff]
    %v101 = vld [vmem:[#allocation8 + $0x20] sm:$0xff]
    %v102 = vld [vmem:[#allocation8 + $0x28] sm:$0xff]
    %v103 = vld [vmem:[#allocation8 + $0x30] sm:$0xff]
    %v104 = vld [vmem:[#allocation8 + $0x38] sm:$0xff]
    %v105 = vld [vmem:[#allocation8 + $0x40] sm:$0xff]
    %v106 = vld [vmem:[#allocation8 + $0x48] sm:$0xff]
    %v107 = vld [vmem:[#allocation8 + $0x50] sm:$0xff]
    %v108 = vld [vmem:[#allocation8 + $0x58] sm:$0xff]
    %v109 = vld [vmem:[#allocation8 + $0x60] sm:$0xff]
    %v110 = vld [vmem:[#allocation8 + $0x68] sm:$0xff]
    %v111 = vld [vmem:[#allocation8 + $0x70] sm:$0xff]
    %v112 = vld [vmem:[#allocation8 + $0x78] sm:$0xff]
    %v113 = vld [vmem:[#allocation8 + $0x80] sm:$0xff]
    %v114 = vld [vmem:[#allocation8 + $0x88] sm:$0xff]
    %v115 = vld [vmem:[#allocation8 + $0x90] sm:$0xff]
    %v116 = vld [vmem:[#allocation8 + $0x98] sm:$0xff]
    %v117 = vld [vmem:[#allocation8 + $0xa0] sm:$0xff]
    %v118 = vld [vmem:[#allocation8 + $0xa8] sm:$0xff]
    %v119 = vld [vmem:[#allocation8 + $0xb0] sm:$0xff]
    %v120 = vld [vmem:[#allocation8 + $0xb8] sm:$0xff]
    %v121 = vld [vmem:[#allocation8 + $0xc0] sm:$0xff]
    %v122 = vld [vmem:[#allocation8 + $0xc8] sm:$0xff]
    %v123 = vld [vmem:[#allocation8 + $0xd0] sm:$0xff]
    %v124 = vld [vmem:[#allocation8 + $0xd8] sm:$0xff]
    %v125 = vld [vmem:[#allocation8 + $0xe0] sm:$0xff]
    %v126 = vld [vmem:[#allocation8 + $0xe8] sm:$0xff]
    %v127 = vld [vmem:[#allocation8 + $0xf0] sm:$0xff]
    %v128 = vld [vmem:[#allocation8 + $0xf8] sm:$0xff]
    %v129 = vld [vmem:[#allocation8 + $0x100] sm:$0xff]
    %v130 = vld [vmem:[#allocation8 + $0x108] sm:$0xff]
    %v131 = vld [vmem:[#allocation8 + $0x110] sm:$0xff]
    %v132 = vld [vmem:[#allocation8 + $0x118] sm:$0xff]
    %v133 = vld [vmem:[#allocation8 + $0x120] sm:$0xff]
    %v134 = vld [vmem:[#allocation8 + $0x128] sm:$0xff]
    %v135 = vld [vmem:[#allocation8 + $0x130] sm:$0xff]
    %v136 = vld [vmem:[#allocation8 + $0x138] sm:$0xff]
    %v137 = vld [vmem:[#allocation8 + $0x140] sm:$0xff]
    %v138 = vld [vmem:[#allocation8 + $0x148] sm:$0xff]
    %v139 = vld [vmem:[#allocation8 + $0x150] sm:$0xff]
    %v140 = vld [vmem:[#allocation8 + $0x158] sm:$0xff]
    %v141 = vld [vmem:[#allocation8 + $0x160] sm:$0xff]
    %v142 = vld [vmem:[#allocation8 + $0x168] sm:$0xff]
    %v143 = vld [vmem:[#allocation8 + $0x170] sm:$0xff]
    %v144 = vld [vmem:[#allocation8 + $0x178] sm:$0xff]
    %v145 = vld [vmem:[#allocation8 + $0x180] sm:$0xff]
    %v146 = vld [vmem:[#allocation8 + $0x188] sm:$0xff]
    %v147 = vld [vmem:[#allocation8 + $0x190] sm:$0xff]
    %v148 = vld [vmem:[#allocation8 + $0x198] sm:$0xff]
    %v149 = vld [vmem:[#allocation8 + $0x1a0] sm:$0xff]
    %v150 = vld [vmem:[#allocation8 + $0x1a8] sm:$0xff]
    %v151 = vld [vmem:[#allocation8 + $0x1b0] sm:$0xff]
    %v152 = vld [vmem:[#allocation8 + $0x1b8] sm:$0xff]
    %v153 = vld [vmem:[#allocation8 + $0x1c0] sm:$0xff]
    %v154 = vld [vmem:[#allocation8 + $0x1c8] sm:$0xff]
    %v155 = vld [vmem:[#allocation8 + $0x1d0] sm:$0xff]
    %v156 = vld [vmem:[#allocation8 + $0x1d8] sm:$0xff]
    %v157 = vld [vmem:[#allocation8 + $0x1e0] sm:$0xff]
    %v158 = vld [vmem:[#allocation8 + $0x1e8] sm:$0xff]
    %v159 = vld [vmem:[#allocation8 + $0x1f0] sm:$0xff]
    %v160 = vld [vmem:[#allocation8 + $0x1f8] sm:$0xff]
    %v161 = vld [vmem:[%s4] sm:$0xf]
    %v163 = vlaneseq
    %v164 = vshrl.u32 %v163, 7
    %v165 = vsub.s32 0, %v164
    %v166 = vrot.slane %v161, %v165
    %v167 = vlaneseq
    %v168 = vshrl.u32 %v167, 7
    %v169 = vsub.s32 1, %v168
    %v170 = vrot.slane %v161, %v169
    %v171 = vlaneseq
    %v172 = vshrl.u32 %v171, 7
    %v173 = vsub.s32 2, %v172
    %v174 = vrot.slane %v161, %v173
    %v175 = vlaneseq
    %v176 = vshrl.u32 %v175, 7
    %v177 = vsub.s32 3, %v176
    %v178 = vrot.slane %v161, %v177
    %183 = vmatprep.subr.mxu0 %v98
    %184 = vmatpush1.msra.mxu0 %v97
    %185 = vmatprep.subr.mxu0 %v102
    %186 = vmatpush1.msra.mxu0 %v101
    %187 = vmatprep.subr.mxu0 %v106
    %188 = vmatpush1.msra.mxu0 %v105
    %189 = vmatprep.subr.mxu0 %v110
    %190 = vmatpush1.msra.mxu0 %v109
    %191 = vmatprep.subr.mxu0 %v114
    %192 = vmatpush1.msra.mxu0 %v113
    %193 = vmatprep.subr.mxu0 %v118
    %194 = vmatpush1.msra.mxu0 %v117
    %195 = vmatprep.subr.mxu0 %v122
    %196 = vmatpush1.msra.mxu0 %v121
    %197 = vmatprep.subr.mxu0 %v126
    %198 = vmatpush1.msra.mxu0 %v125
    %199 = vmatprep.subr.mxu0 %v130
    %200 = vmatpush1.msra.mxu0 %v129
    %201 = vmatprep.subr.mxu0 %v134
    %202 = vmatpush1.msra.mxu0 %v133
    %203 = vmatprep.subr.mxu0 %v138
    %204 = vmatpush1.msra.mxu0 %v137
    %205 = vmatprep.subr.mxu0 %v142
    %206 = vmatpush1.msra.mxu0 %v141
    %207 = vmatprep.subr.mxu0 %v146
    %208 = vmatpush1.msra.mxu0 %v145
    %209 = vmatprep.subr.mxu0 %v150
    %210 = vmatpush1.msra.mxu0 %v149
    %211 = vmatprep.subr.mxu0 %v154
    %212 = vmatpush1.msra.mxu0 %v153
    %213 = vmatprep.subr.mxu0 %v158
    %214 = vmatpush1.msra.mxu0 %v157
    %215 = vmatprep.subr.mxu0 0.0
    %216 = vmatpush1.msra.mxu0 0.0
    %217 = vmatprep.subr.mxu0 0.0
    %218 = vmatpush1.msra.mxu0 0.0
    %219 = vmatprep.subr.mxu0 0.0
    %220 = vmatpush1.msra.mxu0 0.0
    %221 = vmatprep.subr.mxu0 0.0
    %222 = vmatpush1.msra.mxu0 0.0
    %223 = vmatprep.subr.mxu0 0.0
    %224 = vmatpush1.msra.mxu0 0.0
    %225 = vmatprep.subr.mxu0 0.0
    %226 = vmatpush1.msra.mxu0 0.0
    %227 = vmatprep.subr.mxu0 0.0
    %228 = vmatpush1.msra.mxu0 0.0
    %229 = vmatprep.subr.mxu0 0.0
    %230 = vmatpush1.msra.mxu0 0.0
    %231 = vmatprep.subr.mxu0 0.0
    %232 = vmatpush1.msra.mxu0 0.0
    %233 = vmatprep.subr.mxu0 0.0
    %234 = vmatpush1.msra.mxu0 0.0
    %235 = vmatprep.subr.mxu0 0.0
    %236 = vmatpush1.msra.mxu0 0.0
    %237 = vmatprep.subr.mxu0 0.0
    %238 = vmatpush1.msra.mxu0 0.0
    %239 = vmatprep.subr.mxu0 0.0
    %240 = vmatpush1.msra.mxu0 0.0
    %241 = vmatprep.subr.mxu0 0.0
    %242 = vmatpush1.msra.mxu0 0.0
    %243 = vmatprep.subr.mxu0 0.0
    %244 = vmatpush1.msra.mxu0 0.0
    %245 = vmatprep.subr.mxu0 0.0
    %246 = vmatpush1.msra.mxu0 0.0
    %247 = vmatprep.mubr.f32.mxu0 0.0
    %248 = vmatmul.mubr.f32.gmra.mrb[0].mxu0 %v96
    %v249 = vpop.f32.mrb[0].mxu0
    %v250 = vadd.f32 %v166, %v249
    %v251 = vpop.f32.mrb[0].mxu0
    %v252 = vadd.f32 %v170, %v251
    %253 = vdwg.mxu0
    %254 = vmatprep.subr.mxu0 %v100
    %255 = vmatpush1.msra.mxu0 %v99
    %256 = vmatprep.subr.mxu0 %v104
    %257 = vmatpush1.msra.mxu0 %v103
    %258 = vmatprep.subr.mxu0 %v108
    %259 = vmatpush1.msra.mxu0 %v107
    %260 = vmatprep.subr.mxu0 %v112
    %261 = vmatpush1.msra.mxu0 %v111
    %262 = vmatprep.subr.mxu0 %v116
    %263 = vmatpush1.msra.mxu0 %v115
    %264 = vmatprep.subr.mxu0 %v120
    %265 = vmatpush1.msra.mxu0 %v119
    %266 = vmatprep.subr.mxu0 %v124
    %267 = vmatpush1.msra.mxu0 %v123
    %268 = vmatprep.subr.mxu0 %v128
    %269 = vmatpush1.msra.mxu0 %v127
    %270 = vmatprep.subr.mxu0 %v132
    %271 = vmatpush1.msra.mxu0 %v131
    %272 = vmatprep.subr.mxu0 %v136
    %273 = vmatpush1.msra.mxu0 %v135
    %274 = vmatprep.subr.mxu0 %v140
    %275 = vmatpush1.msra.mxu0 %v139
    %276 = vmatprep.subr.mxu0 %v144
    %277 = vmatpush1.msra.mxu0 %v143
    %278 = vmatprep.subr.mxu0 %v148
    %279 = vmatpush1.msra.mxu0 %v147
    %280 = vmatprep.subr.mxu0 %v152
    %281 = vmatpush1.msra.mxu0 %v151
    %282 = vmatprep.subr.mxu0 %v156
    %283 = vmatpush1.msra.mxu0 %v155
    %284 = vmatprep.subr.mxu0 %v160
    %285 = vmatpush1.msra.mxu0 %v159
    %286 = vmatprep.subr.mxu0 0.0
    %287 = vmatpush1.msra.mxu0 0.0
    %288 = vmatprep.subr.mxu0 0.0
    %289 = vmatpush1.msra.mxu0 0.0
    %290 = vmatprep.subr.mxu0 0.0
    %291 = vmatpush1.msra.mxu0 0.0
    %292 = vmatprep.subr.mxu0 0.0
    %293 = vmatpush1.msra.mxu0 0.0
    %294 = vmatprep.subr.mxu0 0.0
    %295 = vmatpush1.msra.mxu0 0.0
    %296 = vmatprep.subr.mxu0 0.0
    %297 = vmatpush1.msra.mxu0 0.0
    %298 = vmatprep.subr.mxu0 0.0
    %299 = vmatpush1.msra.mxu0 0.0
    %300 = vmatprep.subr.mxu0 0.0
    %301 = vmatpush1.msra.mxu0 0.0
    %302 = vmatprep.subr.mxu0 0.0
    %303 = vmatpush1.msra.mxu0 0.0
    %304 = vmatprep.subr.mxu0 0.0
    %305 = vmatpush1.msra.mxu0 0.0
    %306 = vmatprep.subr.mxu0 0.0
    %307 = vmatpush1.msra.mxu0 0.0
    %308 = vmatprep.subr.mxu0 0.0
    %309 = vmatpush1.msra.mxu0 0.0
    %310 = vmatprep.subr.mxu0 0.0
    %311 = vmatpush1.msra.mxu0 0.0
    %312 = vmatprep.subr.mxu0 0.0
    %313 = vmatpush1.msra.mxu0 0.0
    %314 = vmatprep.subr.mxu0 0.0
    %315 = vmatpush1.msra.mxu0 0.0
    %316 = vmatprep.subr.mxu0 0.0
    %317 = vmatpush1.msra.mxu0 0.0
    %318 = vmatprep.mubr.f32.mxu0 0.0
    %319 = vmatmul.mubr.f32.gmra.mrb[0].mxu0 %v96
    %v320 = vpop.f32.mrb[0].mxu0
    %v321 = vadd.f32 %v174, %v320
    %v322 = vpop.f32.mrb[0].mxu0
    %v323 = vadd.f32 %v178, %v322
    %324 = vdwg.mxu0
    %v325 = vmul.f32 %v250, 0.5
    %v326 = vmul.f32 %v252, 0.5
    %v327 = vmul.f32 %v321, 0.5
    %v328 = vmul.f32 %v323, 0.5
    %v329 = vtanh.pop %v325
    %v330 = vtanh.pop %v326
    %v331 = vtanh.pop %v327
    %v332 = vtanh.pop %v328
    %v333 = vadd.f32 %v329, 1.0
    %v334 = vadd.f32 %v330, 1.0
    %v335 = vadd.f32 %v331, 1.0
    %v336 = vadd.f32 %v332, 1.0
    %v337 = vmul.f32 %v333, 0.5
    %v338 = vmul.f32 %v334, 0.5
    %v339 = vmul.f32 %v335, 0.5
    %v340 = vmul.f32 %v336, 0.5
    %v341 = vmul.f32 %v250, %v337
    %v342 = vmul.f32 %v252, %v338
    %v343 = vmul.f32 %v321, %v339
    %v344 = vmul.f32 %v323, %v340
    %v345 = vld [vmem:[#allocation10] sm:$0xff]
    %v346 = vld [vmem:[#allocation10 + $0x8] sm:$0xff]
    %v347 = vld [vmem:[#allocation10 + $0x10] sm:$0xff]
    %v348 = vld [vmem:[#allocation10 + $0x18] sm:$0xff]
    %v349 = vld [vmem:[#allocation10 + $0x20] sm:$0xff]
    %v350 = vld [vmem:[#allocation10 + $0x28] sm:$0xff]
    %v351 = vld [vmem:[#allocation10 + $0x30] sm:$0xff]
    %v352 = vld [vmem:[#allocation10 + $0x38] sm:$0xff]
    %v353 = vld [vmem:[#allocation10 + $0x40] sm:$0xff]
    %v354 = vld [vmem:[#allocation10 + $0x48] sm:$0xff]
    %v355 = vld [vmem:[#allocation10 + $0x50] sm:$0xff]
    %v356 = vld [vmem:[#allocation10 + $0x58] sm:$0xff]
    %v357 = vld [vmem:[#allocation10 + $0x60] sm:$0xff]
    %v358 = vld [vmem:[#allocation10 + $0x68] sm:$0xff]
    %v359 = vld [vmem:[#allocation10 + $0x70] sm:$0xff]
    %v360 = vld [vmem:[#allocation10 + $0x78] sm:$0xff]
    %v361 = vld [vmem:[#allocation10 + $0x80] sm:$0xff]
    %v362 = vld [vmem:[#allocation10 + $0x88] sm:$0xff]
    %v363 = vld [vmem:[#allocation10 + $0x90] sm:$0xff]
    %v364 = vld [vmem:[#allocation10 + $0x98] sm:$0xff]
    %v365 = vld [vmem:[#allocation10 + $0xa0] sm:$0xff]
    %v366 = vld [vmem:[#allocation10 + $0xa8] sm:$0xff]
    %v367 = vld [vmem:[#allocation10 + $0xb0] sm:$0xff]
    %v368 = vld [vmem:[#allocation10 + $0xb8] sm:$0xff]
    %v369 = vld [vmem:[#allocation10 + $0xc0] sm:$0xff]
    %v370 = vld [vmem:[#allocation10 + $0xc8] sm:$0xff]
    %v371 = vld [vmem:[#allocation10 + $0xd0] sm:$0xff]
    %v372 = vld [vmem:[#allocation10 + $0xd8] sm:$0xff]
    %v373 = vld [vmem:[#allocation10 + $0xe0] sm:$0xff]
    %v374 = vld [vmem:[#allocation10 + $0xe8] sm:$0xff]
    %v375 = vld [vmem:[#allocation10 + $0xf0] sm:$0xff]
    %v376 = vld [vmem:[#allocation10 + $0xf8] sm:$0xff]
    %v377 = vld [vmem:[#allocation10 + $0x100] sm:$0xff]
    %v378 = vld [vmem:[#allocation10 + $0x108] sm:$0xff]
    %v379 = vld [vmem:[#allocation10 + $0x110] sm:$0xff]
    %v380 = vld [vmem:[#allocation10 + $0x118] sm:$0xff]
    %v381 = vld [vmem:[#allocation10 + $0x120] sm:$0xff]
    %v382 = vld [vmem:[#allocation10 + $0x128] sm:$0xff]
    %v383 = vld [vmem:[#allocation10 + $0x130] sm:$0xff]
    %v384 = vld [vmem:[#allocation10 + $0x138] sm:$0xff]
    %v385 = vld [vmem:[#allocation10 + $0x140] sm:$0xff]
    %v386 = vld [vmem:[#allocation10 + $0x148] sm:$0xff]
    %v387 = vld [vmem:[#allocation10 + $0x150] sm:$0xff]
    %v388 = vld [vmem:[#allocation10 + $0x158] sm:$0xff]
    %v389 = vld [vmem:[#allocation10 + $0x160] sm:$0xff]
    %v390 = vld [vmem:[#allocation10 + $0x168] sm:$0xff]
    %v391 = vld [vmem:[#allocation10 + $0x170] sm:$0xff]
    %v392 = vld [vmem:[#allocation10 + $0x178] sm:$0xff]
    %v393 = vld [vmem:[#allocation10 + $0x180] sm:$0xff]
    %v394 = vld [vmem:[#allocation10 + $0x188] sm:$0xff]
    %v395 = vld [vmem:[#allocation10 + $0x190] sm:$0xff]
    %v396 = vld [vmem:[#allocation10 + $0x198] sm:$0xff]
    %v397 = vld [vmem:[#allocation10 + $0x1a0] sm:$0xff]
    %v398 = vld [vmem:[#allocation10 + $0x1a8] sm:$0xff]
    %v399 = vld [vmem:[#allocation10 + $0x1b0] sm:$0xff]
    %v400 = vld [vmem:[#allocation10 + $0x1b8] sm:$0xff]
    %v401 = vld [vmem:[#allocation10 + $0x1c0] sm:$0xff]
    %v402 = vld [vmem:[#allocation10 + $0x1c8] sm:$0xff]
    %v403 = vld [vmem:[#allocation10 + $0x1d0] sm:$0xff]
    %v404 = vld [vmem:[#allocation10 + $0x1d8] sm:$0xff]
    %v405 = vld [vmem:[#allocation10 + $0x1e0] sm:$0xff]
    %v406 = vld [vmem:[#allocation10 + $0x1e8] sm:$0xff]
    %v407 = vld [vmem:[#allocation10 + $0x1f0] sm:$0xff]
    %v408 = vld [vmem:[#allocation10 + $0x1f8] sm:$0xff]
    %v409 = vld [vmem:[#allocation10 + $0x200] sm:$0xff]
    %v410 = vld [vmem:[#allocation10 + $0x208] sm:$0xff]
    %v411 = vld [vmem:[#allocation10 + $0x210] sm:$0xff]
    %v412 = vld [vmem:[#allocation10 + $0x218] sm:$0xff]
    %v413 = vld [vmem:[#allocation10 + $0x220] sm:$0xff]
    %v414 = vld [vmem:[#allocation10 + $0x228] sm:$0xff]
    %v415 = vld [vmem:[#allocation10 + $0x230] sm:$0xff]
    %v416 = vld [vmem:[#allocation10 + $0x238] sm:$0xff]
    %v417 = vld [vmem:[#allocation10 + $0x240] sm:$0xff]
    %v418 = vld [vmem:[#allocation10 + $0x248] sm:$0xff]
    %v419 = vld [vmem:[#allocation10 + $0x250] sm:$0xff]
    %v420 = vld [vmem:[#allocation10 + $0x258] sm:$0xff]
    %v421 = vld [vmem:[#allocation10 + $0x260] sm:$0xff]
    %v422 = vld [vmem:[#allocation10 + $0x268] sm:$0xff]
    %v423 = vld [vmem:[#allocation10 + $0x270] sm:$0xff]
    %v424 = vld [vmem:[#allocation10 + $0x278] sm:$0xff]
    %v425 = vld [vmem:[#allocation10 + $0x280] sm:$0xff]
    %v426 = vld [vmem:[#allocation10 + $0x288] sm:$0xff]
    %v427 = vld [vmem:[#allocation10 + $0x290] sm:$0xff]
    %v428 = vld [vmem:[#allocation10 + $0x298] sm:$0xff]
    %v429 = vld [vmem:[#allocation10 + $0x2a0] sm:$0xff]
    %v430 = vld [vmem:[#allocation10 + $0x2a8] sm:$0xff]
    %v431 = vld [vmem:[#allocation10 + $0x2b0] sm:$0xff]
    %v432 = vld [vmem:[#allocation10 + $0x2b8] sm:$0xff]
    %v433 = vld [vmem:[#allocation10 + $0x2c0] sm:$0xff]
    %v434 = vld [vmem:[#allocation10 + $0x2c8] sm:$0xff]
    %v435 = vld [vmem:[#allocation10 + $0x2d0] sm:$0xff]
    %v436 = vld [vmem:[#allocation10 + $0x2d8] sm:$0xff]
    %v437 = vld [vmem:[#allocation10 + $0x2e0] sm:$0xff]
    %v438 = vld [vmem:[#allocation10 + $0x2e8] sm:$0xff]
    %v439 = vld [vmem:[#allocation10 + $0x2f0] sm:$0xff]
    %v440 = vld [vmem:[#allocation10 + $0x2f8] sm:$0xff]
    %v441 = vld [vmem:[#allocation10 + $0x300] sm:$0xff]
    %v442 = vld [vmem:[#allocation10 + $0x308] sm:$0xff]
    %v443 = vld [vmem:[#allocation10 + $0x310] sm:$0xff]
    %v444 = vld [vmem:[#allocation10 + $0x318] sm:$0xff]
    %v445 = vld [vmem:[#allocation10 + $0x320] sm:$0xff]
    %v446 = vld [vmem:[#allocation10 + $0x328] sm:$0xff]
    %v447 = vld [vmem:[#allocation10 + $0x330] sm:$0xff]
    %v448 = vld [vmem:[#allocation10 + $0x338] sm:$0xff]
    %v449 = vld [vmem:[#allocation10 + $0x340] sm:$0xff]
    %v450 = vld [vmem:[#allocation10 + $0x348] sm:$0xff]
    %v451 = vld [vmem:[#allocation10 + $0x350] sm:$0xff]
    %v452 = vld [vmem:[#allocation10 + $0x358] sm:$0xff]
    %v453 = vld [vmem:[#allocation10 + $0x360] sm:$0xff]
    %v454 = vld [vmem:[#allocation10 + $0x368] sm:$0xff]
    %v455 = vld [vmem:[#allocation10 + $0x370] sm:$0xff]
    %v456 = vld [vmem:[#allocation10 + $0x378] sm:$0xff]
    %v457 = vld [vmem:[#allocation10 + $0x380] sm:$0xff]
    %v458 = vld [vmem:[#allocation10 + $0x388] sm:$0xff]
    %v459 = vld [vmem:[#allocation10 + $0x390] sm:$0xff]
    %v460 = vld [vmem:[#allocation10 + $0x398] sm:$0xff]
    %v461 = vld [vmem:[#allocation10 + $0x3a0] sm:$0xff]
    %v462 = vld [vmem:[#allocation10 + $0x3a8] sm:$0xff]
    %v463 = vld [vmem:[#allocation10 + $0x3b0] sm:$0xff]
    %v464 = vld [vmem:[#allocation10 + $0x3b8] sm:$0xff]
    %v465 = vld [vmem:[#allocation10 + $0x3c0] sm:$0xff]
    %v466 = vld [vmem:[#allocation10 + $0x3c8] sm:$0xff]
    %v467 = vld [vmem:[#allocation10 + $0x3d0] sm:$0xff]
    %v468 = vld [vmem:[#allocation10 + $0x3d8] sm:$0xff]
    %v469 = vld [vmem:[#allocation10 + $0x3e0] sm:$0xff]
    %v470 = vld [vmem:[#allocation10 + $0x3e8] sm:$0xff]
    %v471 = vld [vmem:[#allocation10 + $0x3f0] sm:$0xff]
    %v472 = vld [vmem:[#allocation10 + $0x3f8] sm:$0xff]
    %v473 = vld [vmem:[#allocation10 + $0x400] sm:$0xff]
    %v474 = vld [vmem:[#allocation10 + $0x408] sm:$0xff]
    %v475 = vld [vmem:[#allocation10 + $0x410] sm:$0xff]
    %v476 = vld [vmem:[#allocation10 + $0x418] sm:$0xff]
    %v477 = vld [vmem:[#allocation10 + $0x420] sm:$0xff]
    %v478 = vld [vmem:[#allocation10 + $0x428] sm:$0xff]
    %v479 = vld [vmem:[#allocation10 + $0x430] sm:$0xff]
    %v480 = vld [vmem:[#allocation10 + $0x438] sm:$0xff]
    %v481 = vld [vmem:[#allocation10 + $0x440] sm:$0xff]
    %v482 = vld [vmem:[#allocation10 + $0x448] sm:$0xff]
    %v483 = vld [vmem:[#allocation10 + $0x450] sm:$0xff]
    %v484 = vld [vmem:[#allocation10 + $0x458] sm:$0xff]
    %v485 = vld [vmem:[#allocation10 + $0x460] sm:$0xff]
    %v486 = vld [vmem:[#allocation10 + $0x468] sm:$0xff]
    %v487 = vld [vmem:[#allocation10 + $0x470] sm:$0xff]
    %v488 = vld [vmem:[#allocation10 + $0x478] sm:$0xff]
    %v489 = vld [vmem:[#allocation10 + $0x480] sm:$0xff]
    %v490 = vld [vmem:[#allocation10 + $0x488] sm:$0xff]
    %v491 = vld [vmem:[#allocation10 + $0x490] sm:$0xff]
    %v492 = vld [vmem:[#allocation10 + $0x498] sm:$0xff]
    %v493 = vld [vmem:[#allocation10 + $0x4a0] sm:$0xff]
    %v494 = vld [vmem:[#allocation10 + $0x4a8] sm:$0xff]
    %v495 = vld [vmem:[#allocation10 + $0x4b0] sm:$0xff]
    %v496 = vld [vmem:[#allocation10 + $0x4b8] sm:$0xff]
    %v497 = vld [vmem:[#allocation10 + $0x4c0] sm:$0xff]
    %v498 = vld [vmem:[#allocation10 + $0x4c8] sm:$0xff]
    %v499 = vld [vmem:[#allocation10 + $0x4d0] sm:$0xff]
    %v500 = vld [vmem:[#allocation10 + $0x4d8] sm:$0xff]
    %v501 = vld [vmem:[#allocation10 + $0x4e0] sm:$0xff]
    %v502 = vld [vmem:[#allocation10 + $0x4e8] sm:$0xff]
    %v503 = vld [vmem:[#allocation10 + $0x4f0] sm:$0xff]
    %v504 = vld [vmem:[#allocation10 + $0x4f8] sm:$0xff]
    %v505 = vld [vmem:[#allocation10 + $0x500] sm:$0xff]
    %v506 = vld [vmem:[#allocation10 + $0x508] sm:$0xff]
    %v507 = vld [vmem:[#allocation10 + $0x510] sm:$0xff]
    %v508 = vld [vmem:[#allocation10 + $0x518] sm:$0xff]
    %v509 = vld [vmem:[#allocation10 + $0x520] sm:$0xff]
    %v510 = vld [vmem:[#allocation10 + $0x528] sm:$0xff]
    %v511 = vld [vmem:[#allocation10 + $0x530] sm:$0xff]
    %v512 = vld [vmem:[#allocation10 + $0x538] sm:$0xff]
    %v513 = vld [vmem:[#allocation10 + $0x540] sm:$0xff]
    %v514 = vld [vmem:[#allocation10 + $0x548] sm:$0xff]
    %v515 = vld [vmem:[#allocation10 + $0x550] sm:$0xff]
    %v516 = vld [vmem:[#allocation10 + $0x558] sm:$0xff]
    %v517 = vld [vmem:[#allocation10 + $0x560] sm:$0xff]
    %v518 = vld [vmem:[#allocation10 + $0x568] sm:$0xff]
    %v519 = vld [vmem:[#allocation10 + $0x570] sm:$0xff]
    %v520 = vld [vmem:[#allocation10 + $0x578] sm:$0xff]
    %v521 = vld [vmem:[#allocation10 + $0x580] sm:$0xff]
    %v522 = vld [vmem:[#allocation10 + $0x588] sm:$0xff]
    %v523 = vld [vmem:[#allocation10 + $0x590] sm:$0xff]
    %v524 = vld [vmem:[#allocation10 + $0x598] sm:$0xff]
    %v525 = vld [vmem:[#allocation10 + $0x5a0] sm:$0xff]
    %v526 = vld [vmem:[#allocation10 + $0x5a8] sm:$0xff]
    %v527 = vld [vmem:[#allocation10 + $0x5b0] sm:$0xff]
    %v528 = vld [vmem:[#allocation10 + $0x5b8] sm:$0xff]
    %v529 = vld [vmem:[#allocation10 + $0x5c0] sm:$0xff]
    %v530 = vld [vmem:[#allocation10 + $0x5c8] sm:$0xff]
    %v531 = vld [vmem:[#allocation10 + $0x5d0] sm:$0xff]
    %v532 = vld [vmem:[#allocation10 + $0x5d8] sm:$0xff]
    %v533 = vld [vmem:[#allocation10 + $0x5e0] sm:$0xff]
    %v534 = vld [vmem:[#allocation10 + $0x5e8] sm:$0xff]
    %v535 = vld [vmem:[#allocation10 + $0x5f0] sm:$0xff]
    %v536 = vld [vmem:[#allocation10 + $0x5f8] sm:$0xff]
    %v537 = vld [vmem:[#allocation10 + $0x600] sm:$0xff]
    %v538 = vld [vmem:[#allocation10 + $0x608] sm:$0xff]
    %v539 = vld [vmem:[#allocation10 + $0x610] sm:$0xff]
    %v540 = vld [vmem:[#allocation10 + $0x618] sm:$0xff]
    %v541 = vld [vmem:[#allocation10 + $0x620] sm:$0xff]
    %v542 = vld [vmem:[#allocation10 + $0x628] sm:$0xff]
    %v543 = vld [vmem:[#allocation10 + $0x630] sm:$0xff]
    %v544 = vld [vmem:[#allocation10 + $0x638] sm:$0xff]
    %v545 = vld [vmem:[#allocation10 + $0x640] sm:$0xff]
    %v546 = vld [vmem:[#allocation10 + $0x648] sm:$0xff]
    %v547 = vld [vmem:[#allocation10 + $0x650] sm:$0xff]
    %v548 = vld [vmem:[#allocation10 + $0x658] sm:$0xff]
    %v549 = vld [vmem:[#allocation10 + $0x660] sm:$0xff]
    %v550 = vld [vmem:[#allocation10 + $0x668] sm:$0xff]
    %v551 = vld [vmem:[#allocation10 + $0x670] sm:$0xff]
    %v552 = vld [vmem:[#allocation10 + $0x678] sm:$0xff]
    %v553 = vld [vmem:[#allocation10 + $0x680] sm:$0xff]
    %v554 = vld [vmem:[#allocation10 + $0x688] sm:$0xff]
    %v555 = vld [vmem:[#allocation10 + $0x690] sm:$0xff]
    %v556 = vld [vmem:[#allocation10 + $0x698] sm:$0xff]
    %v557 = vld [vmem:[#allocation10 + $0x6a0] sm:$0xff]
    %v558 = vld [vmem:[#allocation10 + $0x6a8] sm:$0xff]
    %v559 = vld [vmem:[#allocation10 + $0x6b0] sm:$0xff]
    %v560 = vld [vmem:[#allocation10 + $0x6b8] sm:$0xff]
    %v561 = vld [vmem:[#allocation10 + $0x6c0] sm:$0xff]
    %v562 = vld [vmem:[#allocation10 + $0x6c8] sm:$0xff]
    %v563 = vld [vmem:[#allocation10 + $0x6d0] sm:$0xff]
    %v564 = vld [vmem:[#allocation10 + $0x6d8] sm:$0xff]
    %v565 = vld [vmem:[#allocation10 + $0x6e0] sm:$0xff]
    %v566 = vld [vmem:[#allocation10 + $0x6e8] sm:$0xff]
    %v567 = vld [vmem:[#allocation10 + $0x6f0] sm:$0xff]
    %v568 = vld [vmem:[#allocation10 + $0x6f8] sm:$0xff]
    %v569 = vld [vmem:[#allocation10 + $0x700] sm:$0xff]
    %v570 = vld [vmem:[#allocation10 + $0x708] sm:$0xff]
    %v571 = vld [vmem:[#allocation10 + $0x710] sm:$0xff]
    %v572 = vld [vmem:[#allocation10 + $0x718] sm:$0xff]
    %v573 = vld [vmem:[#allocation10 + $0x720] sm:$0xff]
    %v574 = vld [vmem:[#allocation10 + $0x728] sm:$0xff]
    %v575 = vld [vmem:[#allocation10 + $0x730] sm:$0xff]
    %v576 = vld [vmem:[#allocation10 + $0x738] sm:$0xff]
    %v577 = vld [vmem:[#allocation10 + $0x740] sm:$0xff]
    %v578 = vld [vmem:[#allocation10 + $0x748] sm:$0xff]
    %v579 = vld [vmem:[#allocation10 + $0x750] sm:$0xff]
    %v580 = vld [vmem:[#allocation10 + $0x758] sm:$0xff]
    %v581 = vld [vmem:[#allocation10 + $0x760] sm:$0xff]
    %v582 = vld [vmem:[#allocation10 + $0x768] sm:$0xff]
    %v583 = vld [vmem:[#allocation10 + $0x770] sm:$0xff]
    %v584 = vld [vmem:[#allocation10 + $0x778] sm:$0xff]
    %v585 = vld [vmem:[#allocation10 + $0x780] sm:$0xff]
    %v586 = vld [vmem:[#allocation10 + $0x788] sm:$0xff]
    %v587 = vld [vmem:[#allocation10 + $0x790] sm:$0xff]
    %v588 = vld [vmem:[#allocation10 + $0x798] sm:$0xff]
    %v589 = vld [vmem:[#allocation10 + $0x7a0] sm:$0xff]
    %v590 = vld [vmem:[#allocation10 + $0x7a8] sm:$0xff]
    %v591 = vld [vmem:[#allocation10 + $0x7b0] sm:$0xff]
    %v592 = vld [vmem:[#allocation10 + $0x7b8] sm:$0xff]
    %v593 = vld [vmem:[#allocation10 + $0x7c0] sm:$0xff]
    %v594 = vld [vmem:[#allocation10 + $0x7c8] sm:$0xff]
    %v595 = vld [vmem:[#allocation10 + $0x7d0] sm:$0xff]
    %v596 = vld [vmem:[#allocation10 + $0x7d8] sm:$0xff]
    %v597 = vld [vmem:[#allocation10 + $0x7e0] sm:$0xff]
    %v598 = vld [vmem:[#allocation10 + $0x7e8] sm:$0xff]
    %v599 = vld [vmem:[#allocation10 + $0x7f0] sm:$0xff]
    %v600 = vld [vmem:[#allocation10 + $0x7f8] sm:$0xff]
    %v601 = vld [vmem:[%s6] sm:$0xf]
    %v603 = vlaneseq
    %v604 = vshrl.u32 %v603, 7
    %v605 = vsub.s32 0, %v604
    %v606 = vrot.slane %v601, %v605
    %v607 = vlaneseq
    %v608 = vshrl.u32 %v607, 7
    %v609 = vsub.s32 1, %v608
    %v610 = vrot.slane %v601, %v609
    %v611 = vlaneseq
    %v612 = vshrl.u32 %v611, 7
    %v613 = vsub.s32 2, %v612
    %v614 = vrot.slane %v601, %v613
    %v615 = vlaneseq
    %v616 = vshrl.u32 %v615, 7
    %v617 = vsub.s32 3, %v616
    %v618 = vrot.slane %v601, %v617
    %623 = vmatprep.subr.mxu0 %v346
    %624 = vmatpush1.msra.mxu0 %v345
    %625 = vmatprep.subr.mxu0 %v350
    %626 = vmatpush1.msra.mxu0 %v349
    %627 = vmatprep.subr.mxu0 %v354
    %628 = vmatpush1.msra.mxu0 %v353
    %629 = vmatprep.subr.mxu0 %v358
    %630 = vmatpush1.msra.mxu0 %v357
    %631 = vmatprep.subr.mxu0 %v362
    %632 = vmatpush1.msra.mxu0 %v361
    %633 = vmatprep.subr.mxu0 %v366
    %634 = vmatpush1.msra.mxu0 %v365
    %635 = vmatprep.subr.mxu0 %v370
    %636 = vmatpush1.msra.mxu0 %v369
    %637 = vmatprep.subr.mxu0 %v374
    %638 = vmatpush1.msra.mxu0 %v373
    %639 = vmatprep.subr.mxu0 %v378
    %640 = vmatpush1.msra.mxu0 %v377
    %641 = vmatprep.subr.mxu0 %v382
    %642 = vmatpush1.msra.mxu0 %v381
    %643 = vmatprep.subr.mxu0 %v386
    %644 = vmatpush1.msra.mxu0 %v385
    %645 = vmatprep.subr.mxu0 %v390
    %646 = vmatpush1.msra.mxu0 %v389
    %647 = vmatprep.subr.mxu0 %v394
    %648 = vmatpush1.msra.mxu0 %v393
    %649 = vmatprep.subr.mxu0 %v398
    %650 = vmatpush1.msra.mxu0 %v397
    %651 = vmatprep.subr.mxu0 %v402
    %652 = vmatpush1.msra.mxu0 %v401
    %653 = vmatprep.subr.mxu0 %v406
    %654 = vmatpush1.msra.mxu0 %v405
    %655 = vmatprep.subr.mxu0 %v410
    %656 = vmatpush1.msra.mxu0 %v409
    %657 = vmatprep.subr.mxu0 %v414
    %658 = vmatpush1.msra.mxu0 %v413
    %659 = vmatprep.subr.mxu0 %v418
    %660 = vmatpush1.msra.mxu0 %v417
    %661 = vmatprep.subr.mxu0 %v422
    %662 = vmatpush1.msra.mxu0 %v421
    %663 = vmatprep.subr.mxu0 %v426
    %664 = vmatpush1.msra.mxu0 %v425
    %665 = vmatprep.subr.mxu0 %v430
    %666 = vmatpush1.msra.mxu0 %v429
    %667 = vmatprep.subr.mxu0 %v434
    %668 = vmatpush1.msra.mxu0 %v433
    %669 = vmatprep.subr.mxu0 %v438
    %670 = vmatpush1.msra.mxu0 %v437
    %671 = vmatprep.subr.mxu0 %v442
    %672 = vmatpush1.msra.mxu0 %v441
    %673 = vmatprep.subr.mxu0 %v446
    %674 = vmatpush1.msra.mxu0 %v445
    %675 = vmatprep.subr.mxu0 %v450
    %676 = vmatpush1.msra.mxu0 %v449
    %677 = vmatprep.subr.mxu0 %v454
    %678 = vmatpush1.msra.mxu0 %v453
    %679 = vmatprep.subr.mxu0 %v458
    %680 = vmatpush1.msra.mxu0 %v457
    %681 = vmatprep.subr.mxu0 %v462
    %682 = vmatpush1.msra.mxu0 %v461
    %683 = vmatprep.subr.mxu0 %v466
    %684 = vmatpush1.msra.mxu0 %v465
    %685 = vmatprep.subr.mxu0 %v470
    %686 = vmatpush1.msra.mxu0 %v469
    %687 = vmatprep.mubr.f32.mxu0 %v342
    %688 = vmatmul.mubr.f32.gmra.mrb[0].mxu0 %v341
    %v689 = vpop.f32.mrb[0].mxu0
    %v690 = vadd.f32 %v606, %v689
    %v691 = vpop.f32.mrb[0].mxu0
    %v692 = vadd.f32 %v610, %v691
    %693 = vdwg.mxu0
    %694 = vmatprep.subr.mxu0 %v474
    %695 = vmatpush1.msra.mxu0 %v473
    %696 = vmatprep.subr.mxu0 %v478
    %697 = vmatpush1.msra.mxu0 %v477
    %698 = vmatprep.subr.mxu0 %v482
    %699 = vmatpush1.msra.mxu0 %v481
    %700 = vmatprep.subr.mxu0 %v486
    %701 = vmatpush1.msra.mxu0 %v485
    %702 = vmatprep.subr.mxu0 %v490
    %703 = vmatpush1.msra.mxu0 %v489
    %704 = vmatprep.subr.mxu0 %v494
    %705 = vmatpush1.msra.mxu0 %v493
    %706 = vmatprep.subr.mxu0 %v498
    %707 = vmatpush1.msra.mxu0 %v497
    %708 = vmatprep.subr.mxu0 %v502
    %709 = vmatpush1.msra.mxu0 %v501
    %710 = vmatprep.subr.mxu0 %v506
    %711 = vmatpush1.msra.mxu0 %v505
    %712 = vmatprep.subr.mxu0 %v510
    %713 = vmatpush1.msra.mxu0 %v509
    %714 = vmatprep.subr.mxu0 %v514
    %715 = vmatpush1.msra.mxu0 %v513
    %716 = vmatprep.subr.mxu0 %v518
    %717 = vmatpush1.msra.mxu0 %v517
    %718 = vmatprep.subr.mxu0 %v522
    %719 = vmatpush1.msra.mxu0 %v521
    %720 = vmatprep.subr.mxu0 %v526
    %721 = vmatpush1.msra.mxu0 %v525
    %722 = vmatprep.subr.mxu0 %v530
    %723 = vmatpush1.msra.mxu0 %v529
    %724 = vmatprep.subr.mxu0 %v534
    %725 = vmatpush1.msra.mxu0 %v533
    %726 = vmatprep.subr.mxu0 %v538
    %727 = vmatpush1.msra.mxu0 %v537
    %728 = vmatprep.subr.mxu0 %v542
    %729 = vmatpush1.msra.mxu0 %v541
    %730 = vmatprep.subr.mxu0 %v546
    %731 = vmatpush1.msra.mxu0 %v545
    %732 = vmatprep.subr.mxu0 %v550
    %733 = vmatpush1.msra.mxu0 %v549
    %734 = vmatprep.subr.mxu0 %v554
    %735 = vmatpush1.msra.mxu0 %v553
    %736 = vmatprep.subr.mxu0 %v558
    %737 = vmatpush1.msra.mxu0 %v557
    %738 = vmatprep.subr.mxu0 %v562
    %739 = vmatpush1.msra.mxu0 %v561
    %740 = vmatprep.subr.mxu0 %v566
    %741 = vmatpush1.msra.mxu0 %v565
    %742 = vmatprep.subr.mxu0 %v570
    %743 = vmatpush1.msra.mxu0 %v569
    %744 = vmatprep.subr.mxu0 %v574
    %745 = vmatpush1.msra.mxu0 %v573
    %746 = vmatprep.subr.mxu0 %v578
    %747 = vmatpush1.msra.mxu0 %v577
    %748 = vmatprep.subr.mxu0 %v582
    %749 = vmatpush1.msra.mxu0 %v581
    %750 = vmatprep.subr.mxu0 %v586
    %751 = vmatpush1.msra.mxu0 %v585
    %752 = vmatprep.subr.mxu0 %v590
    %753 = vmatpush1.msra.mxu0 %v589
    %754 = vmatprep.subr.mxu0 %v594
    %755 = vmatpush1.msra.mxu0 %v593
    %756 = vmatprep.subr.mxu0 %v598
    %757 = vmatpush1.msra.mxu0 %v597
    %758 = vmatprep.mubr.f32.mxu0 %v344
    %759 = vmatmul.mubr.f32.gmra.mrb[0].mxu0 %v343
    %v760 = vpop.f32.mrb[0].mxu0
    %v761 = vadd.f32 %v690, %v760
    %v762 = vpop.f32.mrb[0].mxu0
    %v763 = vadd.f32 %v692, %v762
    %764 = vdwg.mxu0
    %765 = vmatprep.subr.mxu0 %v348
    %766 = vmatpush1.msra.mxu0 %v347
    %767 = vmatprep.subr.mxu0 %v352
    %768 = vmatpush1.msra.mxu0 %v351
    %769 = vmatprep.subr.mxu0 %v356
    %770 = vmatpush1.msra.mxu0 %v355
    %771 = vmatprep.subr.mxu0 %v360
    %772 = vmatpush1.msra.mxu0 %v359
    %773 = vmatprep.subr.mxu0 %v364
    %774 = vmatpush1.msra.mxu0 %v363
    %775 = vmatprep.subr.mxu0 %v368
    %776 = vmatpush1.msra.mxu0 %v367
    %777 = vmatprep.subr.mxu0 %v372
    %778 = vmatpush1.msra.mxu0 %v371
    %779 = vmatprep.subr.mxu0 %v376
    %780 = vmatpush1.msra.mxu0 %v375
    %781 = vmatprep.subr.mxu0 %v380
    %782 = vmatpush1.msra.mxu0 %v379
    %783 = vmatprep.subr.mxu0 %v384
    %784 = vmatpush1.msra.mxu0 %v383
    %785 = vmatprep.subr.mxu0 %v388
    %786 = vmatpush1.msra.mxu0 %v387
    %787 = vmatprep.subr.mxu0 %v392
    %788 = vmatpush1.msra.mxu0 %v391
    %789 = vmatprep.subr.mxu0 %v396
    %790 = vmatpush1.msra.mxu0 %v395
    %791 = vmatprep.subr.mxu0 %v400
    %792 = vmatpush1.msra.mxu0 %v399
    %793 = vmatprep.subr.mxu0 %v404
    %794 = vmatpush1.msra.mxu0 %v403
    %795 = vmatprep.subr.mxu0 %v408
    %796 = vmatpush1.msra.mxu0 %v407
    %797 = vmatprep.subr.mxu0 %v412
    %798 = vmatpush1.msra.mxu0 %v411
    %799 = vmatprep.subr.mxu0 %v416
    %800 = vmatpush1.msra.mxu0 %v415
    %801 = vmatprep.subr.mxu0 %v420
    %802 = vmatpush1.msra.mxu0 %v419
    %803 = vmatprep.subr.mxu0 %v424
    %804 = vmatpush1.msra.mxu0 %v423
    %805 = vmatprep.subr.mxu0 %v428
    %806 = vmatpush1.msra.mxu0 %v427
    %807 = vmatprep.subr.mxu0 %v432
    %808 = vmatpush1.msra.mxu0 %v431
    %809 = vmatprep.subr.mxu0 %v436
    %810 = vmatpush1.msra.mxu0 %v435
    %811 = vmatprep.subr.mxu0 %v440
    %812 = vmatpush1.msra.mxu0 %v439
    %813 = vmatprep.subr.mxu0 %v444
    %814 = vmatpush1.msra.mxu0 %v443
    %815 = vmatprep.subr.mxu0 %v448
    %816 = vmatpush1.msra.mxu0 %v447
    %817 = vmatprep.subr.mxu0 %v452
    %818 = vmatpush1.msra.mxu0 %v451
    %819 = vmatprep.subr.mxu0 %v456
    %820 = vmatpush1.msra.mxu0 %v455
    %821 = vmatprep.subr.mxu0 %v460
    %822 = vmatpush1.msra.mxu0 %v459
    %823 = vmatprep.subr.mxu0 %v464
    %824 = vmatpush1.msra.mxu0 %v463
    %825 = vmatprep.subr.mxu0 %v468
    %826 = vmatpush1.msra.mxu0 %v467
    %827 = vmatprep.subr.mxu0 %v472
    %828 = vmatpush1.msra.mxu0 %v471
    %829 = vmatprep.mubr.f32.mxu0 %v342
    %830 = vmatmul.mubr.f32.gmra.mrb[0].mxu0 %v341
    %v831 = vpop.f32.mrb[0].mxu0
    %v832 = vadd.f32 %v614, %v831
    %v833 = vpop.f32.mrb[0].mxu0
    %v834 = vadd.f32 %v618, %v833
    %835 = vdwg.mxu0
    %836 = vmatprep.subr.mxu0 %v476
    %837 = vmatpush1.msra.mxu0 %v475
    %838 = vmatprep.subr.mxu0 %v480
    %839 = vmatpush1.msra.mxu0 %v479
    %840 = vmatprep.subr.mxu0 %v484
    %841 = vmatpush1.msra.mxu0 %v483
    %842 = vmatprep.subr.mxu0 %v488
    %843 = vmatpush1.msra.mxu0 %v487
    %844 = vmatprep.subr.mxu0 %v492
    %845 = vmatpush1.msra.mxu0 %v491
    %846 = vmatprep.subr.mxu0 %v496
    %847 = vmatpush1.msra.mxu0 %v495
    %848 = vmatprep.subr.mxu0 %v500
    %849 = vmatpush1.msra.mxu0 %v499
    %850 = vmatprep.subr.mxu0 %v504
    %851 = vmatpush1.msra.mxu0 %v503
    %852 = vmatprep.subr.mxu0 %v508
    %853 = vmatpush1.msra.mxu0 %v507
    %854 = vmatprep.subr.mxu0 %v512
    %855 = vmatpush1.msra.mxu0 %v511
    %856 = vmatprep.subr.mxu0 %v516
    %857 = vmatpush1.msra.mxu0 %v515
    %858 = vmatprep.subr.mxu0 %v520
    %859 = vmatpush1.msra.mxu0 %v519
    %860 = vmatprep.subr.mxu0 %v524
    %861 = vmatpush1.msra.mxu0 %v523
    %862 = vmatprep.subr.mxu0 %v528
    %863 = vmatpush1.msra.mxu0 %v527
    %864 = vmatprep.subr.mxu0 %v532
    %865 = vmatpush1.msra.mxu0 %v531
    %866 = vmatprep.subr.mxu0 %v536
    %867 = vmatpush1.msra.mxu0 %v535
    %868 = vmatprep.subr.mxu0 %v540
    %869 = vmatpush1.msra.mxu0 %v539
    %870 = vmatprep.subr.mxu0 %v544
    %871 = vmatpush1.msra.mxu0 %v543
    %872 = vmatprep.subr.mxu0 %v548
    %873 = vmatpush1.msra.mxu0 %v547
    %874 = vmatprep.subr.mxu0 %v552
    %875 = vmatpush1.msra.mxu0 %v551
    %876 = vmatprep.subr.mxu0 %v556
    %877 = vmatpush1.msra.mxu0 %v555
    %878 = vmatprep.subr.mxu0 %v560
    %879 = vmatpush1.msra.mxu0 %v559
    %880 = vmatprep.subr.mxu0 %v564
    %881 = vmatpush1.msra.mxu0 %v563
    %882 = vmatprep.subr.mxu0 %v568
    %883 = vmatpush1.msra.mxu0 %v567
    %884 = vmatprep.subr.mxu0 %v572
    %885 = vmatpush1.msra.mxu0 %v571
    %886 = vmatprep.subr.mxu0 %v576
    %887 = vmatpush1.msra.mxu0 %v575
    %888 = vmatprep.subr.mxu0 %v580
    %889 = vmatpush1.msra.mxu0 %v579
    %890 = vmatprep.subr.mxu0 %v584
    %891 = vmatpush1.msra.mxu0 %v583
    %892 = vmatprep.subr.mxu0 %v588
    %893 = vmatpush1.msra.mxu0 %v587
    %894 = vmatprep.subr.mxu0 %v592
    %895 = vmatpush1.msra.mxu0 %v591
    %896 = vmatprep.subr.mxu0 %v596
    %897 = vmatpush1.msra.mxu0 %v595
    %898 = vmatprep.subr.mxu0 %v600
    %899 = vmatpush1.msra.mxu0 %v599
    %900 = vmatprep.mubr.f32.mxu0 %v344
    %901 = vmatmul.mubr.f32.gmra.mrb[0].mxu0 %v343
    %v902 = vpop.f32.mrb[0].mxu0
    %v903 = vadd.f32 %v832, %v902
    %v904 = vpop.f32.mrb[0].mxu0
    %v905 = vadd.f32 %v834, %v904
    %906 = vdwg.mxu0
    %v907 = vmul.f32 %v761, 0.5
    %v908 = vmul.f32 %v763, 0.5
    %v909 = vmul.f32 %v903, 0.5
    %v910 = vmul.f32 %v905, 0.5
    %v911 = vtanh.pop %v907
    %v912 = vtanh.pop %v908
    %v913 = vtanh.pop %v909
    %v914 = vtanh.pop %v910
    %v915 = vadd.f32 %v911, 1.0
    %v916 = vadd.f32 %v912, 1.0
    %v917 = vadd.f32 %v913, 1.0
    %v918 = vadd.f32 %v914, 1.0
    %v919 = vmul.f32 %v915, 0.5
    %v920 = vmul.f32 %v916, 0.5
    %v921 = vmul.f32 %v917, 0.5
    %v922 = vmul.f32 %v918, 0.5
    %v923 = vmul.f32 %v761, %v919
    %v924 = vmul.f32 %v763, %v920
    %v925 = vmul.f32 %v903, %v921
    %v926 = vmul.f32 %v905, %v922
    %v931 = vcombine.low %v923, %v924
    %v932 = vcombine.low %v925, %v926
    %v934 = vunpack.c.l.s4 1966171168
    %v935 = vunpack.c.0.s8 %v934
    %v936 = vlaneseq
    %v937 = vshrl.u32 %v936, 7
    %v938 = vsub.s32 %v935, %v937
    %v939 = vrot.slane %v931, %v938
    %v941 = vunpack.c.l.s4 1966171168
    %v942 = vunpack.c.0.s8 %v941
    %v943 = vlaneseq
    %v944 = vshrl.u32 %v943, 7
    %v945 = vsub.s32 %v942, %v944
    %v946 = vrot.slane %v932, %v945
    %v947 = vcombine.low %v939, %v946
    %v949 = vunpack.c.l.s4 1966171168
    %v950 = vunpack.c.0.s8 %v949
    %v951 = vlaneseq
    %v952 = vshrl.u32 %v951, 7
    %v953 = vsub.s32 %v950, %v952
    %v954 = vrot.slane %v947, %v953
    %v956 = vlaneseq
    %vm957 = vcmp.ge.s32.totalorder %v956, 0
    %vm958 = vcmp.lt.s32.totalorder %v956, 512
    %vm959 = vmand %vm957, %vm958
    %960 = vst.msk [vmem:[#allocation11] sm:$0xf] %vm959, %v954
    // Predicated region
    $region46: #{tpu_custom_call.1} parent=1 // pred_check
      _
    $region47: #{tpu_custom_call.1} parent=1 // pred_check_branch
      %962 = sbr.rel (0) target = $region49
    $region48: #{tpu_custom_call.1} parent=1 // pred_region
      %s964 = ssub.s32 64, 64
      %965 = vsyncadd [#allocation5], %s964
      %s967 = sshll.u32 [#allocation11], 4
      %s968 = int_to_ptr.vmem [resolvable:$true] %s967
      %970 = dma.vmem_to_hbm [thread:$0]  %s968, 64, %s7, [#allocation5]
    $region49: #{tpu_custom_call.1} parent=1 // pred_fallthru
      _
    // Predicated region
    $region50: #{tpu_custom_call.1} parent=1 // pred_check
      _
    $region51: #{tpu_custom_call.1} parent=1 // pred_check_branch
      %972 = sbr.rel (0) target = $region53
    $region52: #{tpu_custom_call.1} parent=1 // pred_region
      %973 = dma.done [#allocation5], 64
    $region53: #{tpu_custom_call.1} parent=1 // pred_fallthru
      _
    %974 = vsyncpa [#allocation4], 1
    %975 = vsyncpa [#allocation9], 1
    %976 = vsyncpa [#allocation5], 1
    %977 = vsyncpa [#allocation6], 1

</llo_original>
